<compile_context>
chip_gen: v7x
topology: tpu7x:2x2x1
jax: 0.10.0
libtpu: 0.0.40
codegen_flags: <defaults>
</compile_context>

<pallas_src>
import functools

import jax
import jax.numpy as jnp
from jax.experimental import pallas as pl
from jax.experimental.pallas import tpu as pltpu

_LANES = 128   # vreg lane width
_STRIP = 32    # row strip (multiple of 8 f32 / 16 bf16 sublane packing)


def _round_up(x, m):
    return (x + m - 1) // m * m


def _dice_kernel(p_ref, t_ref, out_ref, i_acc, d_acc, *,
                 smooth, cols, tile_cols, lane_chunks, n_strips,
                 grid_cols, need_col_mask):
    k = pl.program_id(1)

    @pl.when(k == 0)
    def _():
        i_acc[...] = jnp.zeros_like(i_acc)
        d_acc[...] = jnp.zeros_like(d_acc)

    col0 = k * tile_cols  # first global column of this block (scalar)

    if need_col_mask:
        # Hoisted once; per-chunk mask is just a scalar add + compare + selects.
        lane_iota = jax.lax.broadcasted_iota(jnp.int32, (_STRIP, _LANES), 1)

    # Static per-chunk decision: can this chunk ever overlap the ragged tail?
    last_block_start = (grid_cols - 1) * tile_cols
    chunk_may_oob = [
        need_col_mask and (last_block_start + (c + 1) * _LANES > cols)
        for c in range(lane_chunks)
    ]

    # Strip-mined lane-wise accumulation: partials live in vregs for the whole
    # chunk loop; the VMEM accumulators are read/written once per strip.
    @pl.loop(0, n_strips)
    def _(s):
        r0 = pl.multiple_of(s * _STRIP, _STRIP)
        i_part = jnp.zeros((_STRIP, _LANES), jnp.float32)
        d_part = jnp.zeros((_STRIP, _LANES), jnp.float32)
        for c in range(lane_chunks):  # static, unrolled
            lo = c * _LANES
            pc = jax.nn.sigmoid(
                p_ref[pl.ds(r0, _STRIP), pl.ds(lo, _LANES)].astype(jnp.float32))
            tc = t_ref[pl.ds(r0, _STRIP), pl.ds(lo, _LANES)].astype(jnp.float32)
            if chunk_may_oob[c]:
                valid = (lane_iota + (col0 + lo)) < cols
                pc = jnp.where(valid, pc, 0.0)
                tc = jnp.where(valid, tc, 0.0)
            i_part = i_part + pc * tc
            d_part = d_part + (pc + tc)
        i_acc[pl.ds(r0, _STRIP), :] += i_part
        d_acc[pl.ds(r0, _STRIP), :] += d_part

    @pl.when(k == pl.num_programs(1) - 1)
    def _():
        inter = jnp.sum(i_acc[...], axis=-1, keepdims=True)
        denom = jnp.sum(d_acc[...], axis=-1, keepdims=True) + smooth
        # Exact divide: runs once per row block, accuracy > approx reciprocal.
        out_ref[...] = 1.0 - (2.0 * inter + smooth) / denom


def dice_loss_v2(p, t, smooth=1.0, *, tile_rows=512, tile_cols=None,
                 cast_to_bf16=True):
    """Pallas implementation of DiceLossV2.forward (returns a scalar f32)."""
    N, C, H, W = p.shape
    rows, cols = N * C, H * W

    pf = p.reshape(rows, cols)
    tf = t.reshape(rows, cols)
    if cast_to_bf16:
        # t is a 0/1 mask (exact in bf16); p are logits -> halves HBM reads.
        pf = pf.astype(jnp.bfloat16)
        tf = tf.astype(jnp.bfloat16)

    itemsize = max(pf.dtype.itemsize, tf.dtype.itemsize)
    if tile_cols is None:
        tile_cols = 8192 if itemsize <= 2 else 4096

    # Column tiling: multiple of 128; no wrapper-side padding, ragged tail is
    # masked inside the kernel.
    tile_cols = min(_round_up(tile_cols, _LANES), _round_up(cols, _LANES))
    grid_cols = -(-cols // tile_cols)
    need_col_mask = (cols % tile_cols) != 0
    lane_chunks = tile_cols // _LANES

    # Row tiling: multiple of the 32-row strip; partial last block allowed
    # (garbage rows are discarded before the mean).
    tile_rows = max(_STRIP, _round_up(tile_rows, _STRIP))
    rows_ceil = _round_up(rows, _STRIP)
    tile_rows = min(tile_rows, rows_ceil)
    # v7x megacore: keep >= 2 blocks on the 'parallel' row axis when possible.
    if rows_ceil >= 2 * _STRIP:
        tile_rows = min(tile_rows, max(_STRIP, _round_up((rows + 1) // 2, _STRIP)))
    grid_rows = -(-rows // tile_rows)
    rows_out = grid_rows * tile_rows   # tiny; output blocks divide exactly
    n_strips = tile_rows // _STRIP

    # Explicit VMEM budget: double-buffered input tiles + accumulators + slack,
    # capped at 48 MiB (headroom under v7x's 64 MiB physical VMEM).
    in_tile_bytes = tile_rows * tile_cols * (pf.dtype.itemsize + tf.dtype.itemsize)
    acc_bytes = 2 * tile_rows * _LANES * 4
    vmem_limit = 2 * in_tile_bytes + acc_bytes + 2 * tile_rows * 4 + (2 << 20)
    vmem_limit = int(min(max(vmem_limit, 4 << 20), 48 << 20))

    kernel = functools.partial(
        _dice_kernel, smooth=float(smooth), cols=cols, tile_cols=tile_cols,
        lane_chunks=lane_chunks, n_strips=n_strips, grid_cols=grid_cols,
        need_col_mask=need_col_mask)

    per_row_loss = pl.pallas_call(
        kernel,
        out_shape=jax.ShapeDtypeStruct((rows_out, 1), jnp.float32),
        grid_spec=pltpu.PrefetchScalarGridSpec(
            num_scalar_prefetch=0,
            grid=(grid_rows, grid_cols),
            in_specs=[
                pl.BlockSpec((tile_rows, tile_cols), lambda i, k: (i, k)),
                pl.BlockSpec((tile_rows, tile_cols), lambda i, k: (i, k)),
            ],
            out_specs=pl.BlockSpec((tile_rows, 1), lambda i, k: (i, 0)),
            scratch_shapes=[
                pltpu.VMEM((tile_rows, _LANES), jnp.float32),  # intersection
                pltpu.VMEM((tile_rows, _LANES), jnp.float32),  # p + t (denom)
            ],
        ),
        compiler_params=pltpu.CompilerParams(
            dimension_semantics=("parallel", "arbitrary"),
            vmem_limit_bytes=vmem_limit,
        ),
    )(pf, tf)

    # Tiny final reduction over the N*C real rows (JAX glue).
    return jnp.mean(per_row_loss[:rows, 0])


def _reference_dice_loss(p, t, smooth=1.0):
    p = jax.nn.sigmoid(p.astype(jnp.float32))
    N, C, H, W = p.shape
    pflat = p.reshape(N * C, -1)
    tflat = t.astype(jnp.float32).reshape(N * C, -1)
    inter = jnp.sum(pflat * tflat, axis=1)
    loss = 1.0 - (2.0 * inter + smooth) / (
        jnp.sum(pflat, axis=1) + jnp.sum(tflat, axis=1) + smooth
    )
    return jnp.mean(loss)


if __name__ == "__main__":
    key = jax.random.PRNGKey(0)
    k1, k2, k3, k4, k5, k6 = jax.random.split(key, 6)

    # Primary shape implied by the module: (N, C, H, W) = (2, 4, 16, 16).
    p1 = jax.random.normal(k1, (2, 4, 16, 16), dtype=jnp.float32)
    t1 = (jax.random.uniform(k2, (2, 4, 16, 16)) > 0.5).astype(jnp.float32)
    out1 = jax.block_until_ready(dice_loss_v2(p1, t1, smooth=1.0))
    ref1 = _reference_dice_loss(p1, t1, smooth=1.0)
    assert jnp.allclose(out1, ref1, atol=5e-3, rtol=5e-3), (out1, ref1)

    # Same shape, no bf16 cast (exact f32 path) -> tight tolerance.
    out1_f32 = jax.block_until_ready(
        dice_loss_v2(p1, t1, smooth=1.0, cast_to_bf16=False))
    assert jnp.allclose(out1_f32, ref1, atol=2e-4, rtol=2e-4), (out1_f32, ref1)

    # Ragged shape: rows=6 (partial row block), cols=100 (masked column tail).
    p2 = jax.random.normal(k3, (2, 3, 10, 10), dtype=jnp.float32)
    t2 = (jax.random.uniform(k4, (2, 3, 10, 10)) > 0.5).astype(jnp.float32)
    out2 = jax.block_until_ready(dice_loss_v2(p2, t2, smooth=1.0))
    ref2 = _reference_dice_loss(p2, t2, smooth=1.0)
    assert jnp.allclose(out2, ref2, atol=5e-3, rtol=5e-3), (out2, ref2)

    # Small tiles to exercise multi-block column accumulation + masked tail.
    p3 = jax.random.normal(k5, (1, 2, 16, 20), dtype=jnp.float32)
    t3 = (jax.random.uniform(k6, (1, 2, 16, 20)) > 0.5).astype(jnp.float32)
    out3 = jax.block_until_ready(
        dice_loss_v2(p3, t3, smooth=1.0, tile_rows=32, tile_cols=128))
    ref3 = _reference_dice_loss(p3, t3, smooth=1.0)
    assert jnp.allclose(out3, ref3, atol=5e-3, rtol=5e-3), (out3, ref3)

    print("KERNEL_OK")
</pallas_src>

<mosaic_0001>
module attributes {stable_mosaic.version = 11 : i64} {
  func.func @_dice_kernel(%arg0: i32, %arg1: i32, %arg2: memref<32x256xbf16, #tpu.memory_space<vmem>>, %arg3: memref<32x256xbf16, #tpu.memory_space<vmem>>, %arg4: memref<32x1xf32, #tpu.memory_space<vmem>>, %arg5: memref<32x128xf32, #tpu.memory_space<vmem>>, %arg6: memref<32x128xf32, #tpu.memory_space<vmem>>) attributes {dimension_semantics = [#tpu.dimension_semantics<parallel>, #tpu.dimension_semantics<arbitrary>], iteration_bounds = array<i64: 1, 1>, scalar_prefetch = 0 : i64, scratch_operands = 2 : i64, tpu.core_type = #tpu.core_type<tc>, window_params = [{transform_indices = @transform_0, window_bounds = array<i64: 32, 256>}, {transform_indices = @transform_1, window_bounds = array<i64: 32, 256>}, {transform_indices = @transform_2, window_bounds = array<i64: 32, 1>}]} {
    %c0_i32 = arith.constant 0 : i32
    %0 = arith.cmpi eq, %arg1, %c0_i32 : i32
    %1 = arith.extui %0 : i1 to i32
    %c0_i32_0 = arith.constant 0 : i32
    %2 = arith.cmpi ne, %1, %c0_i32_0 : i32
    scf.if %2 {
      %cst_15 = arith.constant 0.000000e+00 : f32
      %52 = vector.broadcast %cst_15 : f32 to vector<32x128xf32>
      %c0_16 = arith.constant 0 : index
      %c0_17 = arith.constant 0 : index
      %53 = vector.load %arg5[%c0_16, %c0_17] : memref<32x128xf32, #tpu.memory_space<vmem>>, vector<32x128xf32>
      tpu.vector_store %arg5[%c0_16, %c0_17], %52 {strides = array<i32>} : memref<32x128xf32, #tpu.memory_space<vmem>>, vector<32x128xf32>,
      %cst_18 = arith.constant 0.000000e+00 : f32
      %54 = vector.broadcast %cst_18 : f32 to vector<32x128xf32>
      %c0_19 = arith.constant 0 : index
      %c0_20 = arith.constant 0 : index
      %55 = vector.load %arg6[%c0_19, %c0_20] : memref<32x128xf32, #tpu.memory_space<vmem>>, vector<32x128xf32>
      tpu.vector_store %arg6[%c0_19, %c0_20], %54 {strides = array<i32>} : memref<32x128xf32, #tpu.memory_space<vmem>>, vector<32x128xf32>,
    } else {
    }
    %c0_i32_1 = arith.constant 0 : i32
    %c1_i32 = arith.constant 1 : i32
    %3 = arith.muli %c0_i32_1, %c1_i32 : i32
    %c0_i32_2 = arith.constant 0 : i32
    %4 = arith.addi %c0_i32_2, %3 : i32
    %c32_i32 = arith.constant 32 : i32
    %5 = arith.muli %4, %c32_i32 : i32
    %6 = tpu.assume_multiple %5, 32 : i32
    %cst = arith.constant 0.000000e+00 : f32
    %7 = vector.broadcast %cst : f32 to vector<32x128xf32>
    %cst_3 = arith.constant 0.000000e+00 : f32
    %8 = vector.broadcast %cst_3 : f32 to vector<32x128xf32>
    %9 = arith.index_cast %6 : i32 to index
    %c0 = arith.constant 0 : index
    %10 = vector.load %arg2[%9, %c0] : memref<32x256xbf16, #tpu.memory_space<vmem>>, vector<32x128xbf16>
    %11 = arith.extf %10 : vector<32x128xbf16> to vector<32x128xf32>
    %12 = arith.negf %11 : vector<32x128xf32>
    %13 = math.exp %12 : vector<32x128xf32>
    %cst_4 = arith.constant 1.000000e+00 : f32
    %14 = vector.broadcast %cst_4 : f32 to vector<32x128xf32>
    %15 = arith.addf %14, %13 : vector<32x128xf32>
    %16 = arith.divf %14, %15 : vector<32x128xf32>
    %17 = arith.index_cast %6 : i32 to index
    %c0_5 = arith.constant 0 : index
    %18 = vector.load %arg3[%17, %c0_5] : memref<32x256xbf16, #tpu.memory_space<vmem>>, vector<32x128xbf16>
    %19 = arith.extf %18 : vector<32x128xbf16> to vector<32x128xf32>
    %20 = arith.mulf %16, %19 : vector<32x128xf32>
    %21 = arith.addf %7, %20 : vector<32x128xf32>
    %22 = arith.addf %16, %19 : vector<32x128xf32>
    %23 = arith.addf %8, %22 : vector<32x128xf32>
    %24 = arith.index_cast %6 : i32 to index
    %c128 = arith.constant 128 : index
    %25 = vector.load %arg2[%24, %c128] : memref<32x256xbf16, #tpu.memory_space<vmem>>, vector<32x128xbf16>
    %26 = arith.extf %25 : vector<32x128xbf16> to vector<32x128xf32>
    %27 = arith.negf %26 : vector<32x128xf32>
    %28 = math.exp %27 : vector<32x128xf32>
    %cst_6 = arith.constant 1.000000e+00 : f32
    %29 = vector.broadcast %cst_6 : f32 to vector<32x128xf32>
    %30 = arith.addf %29, %28 : vector<32x128xf32>
    %31 = arith.divf %29, %30 : vector<32x128xf32>
    %32 = arith.index_cast %6 : i32 to index
    %c128_7 = arith.constant 128 : index
    %33 = vector.load %arg3[%32, %c128_7] : memref<32x256xbf16, #tpu.memory_space<vmem>>, vector<32x128xbf16>
    %34 = arith.extf %33 : vector<32x128xbf16> to vector<32x128xf32>
    %35 = arith.mulf %31, %34 : vector<32x128xf32>
    %36 = arith.addf %21, %35 : vector<32x128xf32>
    %37 = arith.addf %31, %34 : vector<32x128xf32>
    %38 = arith.addf %23, %37 : vector<32x128xf32>
    %39 = arith.index_cast %6 : i32 to index
    %c0_8 = arith.constant 0 : index
    %40 = vector.load %arg5[%39, %c0_8] : memref<32x128xf32, #tpu.memory_space<vmem>>, vector<32x128xf32>
    %41 = arith.addf %40, %36 : vector<32x128xf32>
    %42 = arith.index_cast %6 : i32 to index
    %c0_9 = arith.constant 0 : index
    %43 = vector.load %arg5[%42, %c0_9] : memref<32x128xf32, #tpu.memory_space<vmem>>, vector<32x128xf32>
    tpu.vector_store %arg5[%42, %c0_9], %41 {strides = array<i32>} : memref<32x128xf32, #tpu.memory_space<vmem>>, vector<32x128xf32>,
    %44 = arith.index_cast %6 : i32 to index
    %c0_10 = arith.constant 0 : index
    %45 = vector.load %arg6[%44, %c0_10] : memref<32x128xf32, #tpu.memory_space<vmem>>, vector<32x128xf32>
    %46 = arith.addf %45, %38 : vector<32x128xf32>
    %47 = arith.index_cast %6 : i32 to index
    %c0_11 = arith.constant 0 : index
    %48 = vector.load %arg6[%47, %c0_11] : memref<32x128xf32, #tpu.memory_space<vmem>>, vector<32x128xf32>
    tpu.vector_store %arg6[%47, %c0_11], %46 {strides = array<i32>} : memref<32x128xf32, #tpu.memory_space<vmem>>, vector<32x128xf32>,
    %c1_i32_12 = arith.constant 1 : i32
    %c0_i32_13 = arith.constant 0 : i32
    %49 = arith.cmpi eq, %arg1, %c0_i32_13 : i32
    %50 = arith.extui %49 : i1 to i32
    %c0_i32_14 = arith.constant 0 : i32
    %51 = arith.cmpi ne, %50, %c0_i32_14 : i32
    scf.if %51 {
      %c0_15 = arith.constant 0 : index
      %c0_16 = arith.constant 0 : index
      %52 = vector.load %arg5[%c0_15, %c0_16] : memref<32x128xf32, #tpu.memory_space<vmem>>, vector<32x128xf32>
      %cst_17 = arith.constant dense<0.000000e+00> : vector<32xf32>
      %53 = vector.multi_reduction <add>, %52, %cst_17 [1] : vector<32x128xf32> to vector<32xf32>
      %54 = vector.shape_cast %53 : vector<32xf32> to vector<32x1xf32>
      %c0_18 = arith.constant 0 : index
      %c0_19 = arith.constant 0 : index
      %55 = vector.load %arg6[%c0_18, %c0_19] : memref<32x128xf32, #tpu.memory_space<vmem>>, vector<32x128xf32>
      %cst_20 = arith.constant dense<0.000000e+00> : vector<32xf32>
      %56 = vector.multi_reduction <add>, %55, %cst_20 [1] : vector<32x128xf32> to vector<32xf32>
      %57 = vector.shape_cast %56 : vector<32xf32> to vector<32x1xf32>
      %cst_21 = arith.constant 1.000000e+00 : f32
      %58 = vector.broadcast %cst_21 : f32 to vector<32x1xf32>
      %59 = arith.addf %57, %58 : vector<32x1xf32>
      %cst_22 = arith.constant 2.000000e+00 : f32
      %60 = vector.broadcast %cst_22 : f32 to vector<32x1xf32>
      %61 = arith.mulf %60, %54 : vector<32x1xf32>
      %cst_23 = arith.constant 1.000000e+00 : f32
      %62 = vector.broadcast %cst_23 : f32 to vector<32x1xf32>
      %63 = arith.addf %61, %62 : vector<32x1xf32>
      %64 = arith.divf %63, %59 : vector<32x1xf32>
      %cst_24 = arith.constant 1.000000e+00 : f32
      %65 = vector.broadcast %cst_24 : f32 to vector<32x1xf32>
      %66 = arith.subf %65, %64 : vector<32x1xf32>
      %c0_25 = arith.constant 0 : index
      %c0_26 = arith.constant 0 : index
      %67 = vector.load %arg4[%c0_25, %c0_26] : memref<32x1xf32, #tpu.memory_space<vmem>>, vector<32x1xf32>
      tpu.vector_store %arg4[%c0_25, %c0_26], %66 {strides = array<i32>} : memref<32x1xf32, #tpu.memory_space<vmem>>, vector<32x1xf32>,
    } else {
    }
    return
  }
  func.func @transform_0(%arg0: i32, %arg1: i32) -> (i32, i32) {
    %c0_i32 = arith.constant 0 : i32
    return %arg0, %arg1 : i32, i32
  }
  func.func @transform_1(%arg0: i32, %arg1: i32) -> (i32, i32) {
    %c0_i32 = arith.constant 0 : i32
    return %arg0, %arg1 : i32, i32
  }
  func.func @transform_2(%arg0: i32, %arg1: i32) -> (i32, i32) {
    %c0_i32 = arith.constant 0 : i32
    %c0_i32_0 = arith.constant 0 : i32
    return %arg0, %c0_i32 : i32, i32
  }
}

</mosaic_0001>

<llo_original>
// kernel: tpu_custom_call.1
$region0: #{tpu_custom_call.1}
  #allocation0 [shape = 'u32[]', space=smem, size = 0x4, offset = 0x4, fixed_abs, tag = 'smem constant byte address 0x4 - core index']
  #allocation1 [shape = 'u32[144,128]{1,0:T(1,128)}', space=vmem, size = 0x12000, scoped, tag = 'internal scratch']
  #allocation2 [shape = 'f32[32,128]{1,0:T(8,128)}', space=vmem, size = 0x4000, scoped, tag = 'scratch operand']
  #allocation3 [shape = 'f32[32,128]{1,0:T(8,128)}', space=vmem, size = 0x4000, scoped, tag = 'scratch operand']
  %s0 = inlined_call_operand.hbm [shape: bf16[8,256], index: 0, kind: input, shape index: {}]
  %s1 = inlined_call_operand.hbm [shape: bf16[8,256], index: 1, kind: input, shape index: {}]
  %s2 = inlined_call_operand.vmem [shape: f32[32,1], index: 2, kind: output, shape index: {}]
  %s3 = sld [smem:[#allocation0]]
  $region34: #{tpu_custom_call.1} parent=0
    _
  %s5 = ssub.s32 1, %s3
  %s6 = scalar_select 0, %s5, %s3
  $region1: #{tpu_custom_call.1} parent=0
    #allocation4 [shape = 'u8[16384]{0}', space=vmem, size = 0x4000, scoped, tag = 'input window, operand 0, single buffered']
    #allocation5 [shape = 's32[1]{0}', space=sflag, size = 0x4, scoped, tag = 'scoped memory for tpu_custom_call.1']
    #allocation6 [shape = 'u8[16384]{0}', space=vmem, size = 0x4000, scoped, tag = 'input window, operand 1, single buffered']
    #allocation7 [shape = 's32[1]{0}', space=sflag, size = 0x4, scoped, tag = 'scoped memory for tpu_custom_call.1']
    %7 = vsyncpa [#allocation5], 0
    %8 = vsyncpa [#allocation7], 0
    // Predicated region
    $region2: #{tpu_custom_call.1} parent=1 // pred_check
      _
    $region3: #{tpu_custom_call.1} parent=1 // pred_check_branch
      %10 = sbr.rel (0) target = $region5
    $region4: #{tpu_custom_call.1} parent=1 // pred_region
      %s12 = ssub.s32 512, 128
      %13 = vsyncadd [#allocation5], %s12
      %s14 = sshll.u32 [#allocation4], 4
      %s15 = int_to_ptr.vmem [resolvable:$true] %s14
      %20 = dma.hbm_to_vmem [thread:$0]  %s0, 128, %s15, [#allocation5], 128, 128, 8
    $region5: #{tpu_custom_call.1} parent=1 // pred_fallthru
      _
    // Predicated region
    $region6: #{tpu_custom_call.1} parent=1 // pred_check
      _
    $region7: #{tpu_custom_call.1} parent=1 // pred_check_branch
      %22 = sbr.rel (0) target = $region9
    $region8: #{tpu_custom_call.1} parent=1 // pred_region
      %s24 = ssub.s32 512, 128
      %25 = vsyncadd [#allocation7], %s24
      %s26 = sshll.u32 [#allocation6], 4
      %s27 = int_to_ptr.vmem [resolvable:$true] %s26
      %32 = dma.hbm_to_vmem [thread:$0]  %s1, 128, %s27, [#allocation7], 128, 128, 8
    $region9: #{tpu_custom_call.1} parent=1 // pred_fallthru
      _
    // Predicated region
    $region10: #{tpu_custom_call.1} parent=1 // pred_check
      _
    $region11: #{tpu_custom_call.1} parent=1 // pred_check_branch
      %34 = sbr.rel (0) target = $region13
    $region12: #{tpu_custom_call.1} parent=1 // pred_region
      %35 = dma.done [#allocation5], 512
    $region13: #{tpu_custom_call.1} parent=1 // pred_fallthru
      _
    // Predicated region
    $region14: #{tpu_custom_call.1} parent=1 // pred_check
      _
    $region15: #{tpu_custom_call.1} parent=1 // pred_check_branch
      %37 = sbr.rel (0) target = $region17
    $region16: #{tpu_custom_call.1} parent=1 // pred_region
      %38 = dma.done [#allocation7], 512
    $region17: #{tpu_custom_call.1} parent=1 // pred_fallthru
      _
    %p39 = scmp.eq.s32.totalorder 0, 0
    // Predicated region
    $region18: #{tpu_custom_call.1} parent=1 // pred_check
      %p40 = pneg %p39
    $region19: #{tpu_custom_call.1} parent=1 // pred_check_branch
      %42 = sbr.rel (%p40) target = $region21
    $region20: #{tpu_custom_call.1} parent=1 // pred_region
      %43 = vst [vmem:[#allocation2] sm:$0xff] 0.0
      %44 = vst [vmem:[#allocation2 + $0x8] sm:$0xff] 0.0
      %45 = vst [vmem:[#allocation2 + $0x10] sm:$0xff] 0.0
      %46 = vst [vmem:[#allocation2 + $0x18] sm:$0xff] 0.0
      %47 = vst [vmem:[#allocation3] sm:$0xff] 0.0
      %48 = vst [vmem:[#allocation3 + $0x8] sm:$0xff] 0.0
      %49 = vst [vmem:[#allocation3 + $0x10] sm:$0xff] 0.0
      %50 = vst [vmem:[#allocation3 + $0x18] sm:$0xff] 0.0
    $region21: #{tpu_custom_call.1} parent=1 // pred_fallthru
      _
    %s51 = smul.u32 0, 2
    %s52 = smul.addr %s51, 4
    %s53 = scalar_lea.vmem [#allocation4], %s52
    %v54 = vld [vmem:[%s53] sm:$0xf]
    %v55 = vld [vmem:[%s53 + $0x8] sm:$0xf]
    %v56 = vld [vmem:[%s53 + $0x10] sm:$0xf]
    %v57 = vld [vmem:[%s53 + $0x18] sm:$0xf]
    %v58 = vunpack.c.l.bf16 %v54
    %v59 = vunpack.c.l.bf16 %v55
    %v60 = vunpack.c.l.bf16 %v56
    %v61 = vunpack.c.l.bf16 %v57
    %v62 = vxor.u32 %v58, 2147483648
    %v63 = vxor.u32 %v59, 2147483648
    %v64 = vxor.u32 %v60, 2147483648
    %v65 = vxor.u32 %v61, 2147483648
    %v66 = vmul.f32 %v62, 1.442695
    %v67 = vpow.pop %v66
    %v68 = vmul.f32 %v63, 1.442695
    %v69 = vpow.pop %v68
    %v70 = vmul.f32 %v64, 1.442695
    %v71 = vpow.pop %v70
    %v72 = vmul.f32 %v65, 1.442695
    %v73 = vpow.pop %v72
    %v74 = vadd.f32 %v67, 1.0
    %v75 = vadd.f32 %v69, 1.0
    %v76 = vadd.f32 %v71, 1.0
    %v77 = vadd.f32 %v73, 1.0
    %v78 = vrcp.pop %v74
    %v79 = vmul.f32 1.0, %v78
    %v80 = vrcp.pop %v75
    %v81 = vmul.f32 1.0, %v80
    %v82 = vrcp.pop %v76
    %v83 = vmul.f32 1.0, %v82
    %v84 = vrcp.pop %v77
    %v85 = vmul.f32 1.0, %v84
    %s86 = smul.addr %s51, 4
    %s87 = scalar_lea.vmem [#allocation6], %s86
    %v88 = vld [vmem:[%s87] sm:$0xf]
    %v89 = vld [vmem:[%s87 + $0x8] sm:$0xf]
    %v90 = vld [vmem:[%s87 + $0x10] sm:$0xf]
    %v91 = vld [vmem:[%s87 + $0x18] sm:$0xf]
    %v92 = vunpack.c.l.bf16 %v88
    %v93 = vunpack.c.l.bf16 %v89
    %v94 = vunpack.c.l.bf16 %v90
    %v95 = vunpack.c.l.bf16 %v91
    %v96 = vmul.f32 %v79, %v92
    %v97 = vmul.f32 %v81, %v93
    %v98 = vmul.f32 %v83, %v94
    %v99 = vmul.f32 %v85, %v95
    %v100 = vadd.f32 %v96, 0.0
    %v101 = vadd.f32 %v97, 0.0
    %v102 = vadd.f32 %v98, 0.0
    %v103 = vadd.f32 %v99, 0.0
    %v104 = vadd.f32 %v79, %v92
    %v105 = vadd.f32 %v81, %v93
    %v106 = vadd.f32 %v83, %v94
    %v107 = vadd.f32 %v85, %v95
    %v108 = vadd.f32 %v104, 0.0
    %v109 = vadd.f32 %v105, 0.0
    %v110 = vadd.f32 %v106, 0.0
    %v111 = vadd.f32 %v107, 0.0
    %v112 = vld [vmem:[%s53 + $0x4] sm:$0xf]
    %v113 = vld [vmem:[%s53 + $0xc] sm:$0xf]
    %v114 = vld [vmem:[%s53 + $0x14] sm:$0xf]
    %v115 = vld [vmem:[%s53 + $0x1c] sm:$0xf]
    %v116 = vunpack.c.l.bf16 %v112
    %v117 = vunpack.c.l.bf16 %v113
    %v118 = vunpack.c.l.bf16 %v114
    %v119 = vunpack.c.l.bf16 %v115
    %v120 = vxor.u32 %v116, 2147483648
    %v121 = vxor.u32 %v117, 2147483648
    %v122 = vxor.u32 %v118, 2147483648
    %v123 = vxor.u32 %v119, 2147483648
    %v124 = vmul.f32 %v120, 1.442695
    %v125 = vpow.pop %v124
    %v126 = vmul.f32 %v121, 1.442695
    %v127 = vpow.pop %v126
    %v128 = vmul.f32 %v122, 1.442695
    %v129 = vpow.pop %v128
    %v130 = vmul.f32 %v123, 1.442695
    %v131 = vpow.pop %v130
    %v132 = vadd.f32 %v125, 1.0
    %v133 = vadd.f32 %v127, 1.0
    %v134 = vadd.f32 %v129, 1.0
    %v135 = vadd.f32 %v131, 1.0
    %v136 = vrcp.pop %v132
    %v137 = vmul.f32 1.0, %v136
    %v138 = vrcp.pop %v133
    %v139 = vmul.f32 1.0, %v138
    %v140 = vrcp.pop %v134
    %v141 = vmul.f32 1.0, %v140
    %v142 = vrcp.pop %v135
    %v143 = vmul.f32 1.0, %v142
    %v144 = vld [vmem:[%s87 + $0x4] sm:$0xf]
    %v145 = vld [vmem:[%s87 + $0xc] sm:$0xf]
    %v146 = vld [vmem:[%s87 + $0x14] sm:$0xf]
    %v147 = vld [vmem:[%s87 + $0x1c] sm:$0xf]
    %v148 = vunpack.c.l.bf16 %v144
    %v149 = vunpack.c.l.bf16 %v145
    %v150 = vunpack.c.l.bf16 %v146
    %v151 = vunpack.c.l.bf16 %v147
    %v152 = vmul.f32 %v137, %v148
    %v153 = vmul.f32 %v139, %v149
    %v154 = vmul.f32 %v141, %v150
    %v155 = vmul.f32 %v143, %v151
    %v156 = vadd.f32 %v100, %v152
    %v157 = vadd.f32 %v101, %v153
    %v158 = vadd.f32 %v102, %v154
    %v159 = vadd.f32 %v103, %v155
    %v160 = vadd.f32 %v137, %v148
    %v161 = vadd.f32 %v139, %v149
    %v162 = vadd.f32 %v141, %v150
    %v163 = vadd.f32 %v143, %v151
    %v164 = vadd.f32 %v108, %v160
    %v165 = vadd.f32 %v109, %v161
    %v166 = vadd.f32 %v110, %v162
    %v167 = vadd.f32 %v111, %v163
    %v168 = vld [vmem:[#allocation2] sm:$0xff]
    %v169 = vld [vmem:[#allocation2 + $0x8] sm:$0xff]
    %v170 = vld [vmem:[#allocation2 + $0x10] sm:$0xff]
    %v171 = vld [vmem:[#allocation2 + $0x18] sm:$0xff]
    %v172 = vadd.f32 %v168, %v156
    %v173 = vadd.f32 %v169, %v157
    %v174 = vadd.f32 %v170, %v158
    %v175 = vadd.f32 %v171, %v159
    %176 = vst [vmem:[#allocation2] sm:$0xff] %v172
    %177 = vst [vmem:[#allocation2 + $0x8] sm:$0xff] %v173
    %178 = vst [vmem:[#allocation2 + $0x10] sm:$0xff] %v174
    %179 = vst [vmem:[#allocation2 + $0x18] sm:$0xff] %v175
    %v180 = vld [vmem:[#allocation3] sm:$0xff]
    %v181 = vld [vmem:[#allocation3 + $0x8] sm:$0xff]
    %v182 = vld [vmem:[#allocation3 + $0x10] sm:$0xff]
    %v183 = vld [vmem:[#allocation3 + $0x18] sm:$0xff]
    %v184 = vadd.f32 %v180, %v164
    %v185 = vadd.f32 %v181, %v165
    %v186 = vadd.f32 %v182, %v166
    %v187 = vadd.f32 %v183, %v167
    %188 = vst [vmem:[#allocation3] sm:$0xff] %v184
    %189 = vst [vmem:[#allocation3 + $0x8] sm:$0xff] %v185
    %190 = vst [vmem:[#allocation3 + $0x10] sm:$0xff] %v186
    %191 = vst [vmem:[#allocation3 + $0x18] sm:$0xff] %v187
    // Predicated region
    $region22: #{tpu_custom_call.1} parent=1 // pred_check
      %p192 = pneg %p39
    $region23: #{tpu_custom_call.1} parent=1 // pred_check_branch
      %194 = sbr.rel (%p192) target = $region25
    $region24: #{tpu_custom_call.1} parent=1 // pred_region
      %v195 = vld [vmem:[#allocation2] sm:$0xff]
      %v196 = vld [vmem:[#allocation2 + $0x8] sm:$0xff]
      %v197 = vld [vmem:[#allocation2 + $0x10] sm:$0xff]
      %v198 = vld [vmem:[#allocation2 + $0x18] sm:$0xff]
      %199 = vadd.xlane.f32.xlu0 %v195
      %v200 = vpop.xlane.xlu0 %199
      %201 = vadd.xlane.f32.xlu0 %v196
      %v202 = vpop.xlane.xlu0 %201
      %203 = vadd.xlane.f32.xlu0 %v197
      %v204 = vpop.xlane.xlu0 %203
      %205 = vadd.xlane.f32.xlu0 %v198
      %v206 = vpop.xlane.xlu0 %205
      %v207 = vld [vmem:[#allocation3] sm:$0xff]
      %v208 = vld [vmem:[#allocation3 + $0x8] sm:$0xff]
      %v209 = vld [vmem:[#allocation3 + $0x10] sm:$0xff]
      %v210 = vld [vmem:[#allocation3 + $0x18] sm:$0xff]
      %211 = vadd.xlane.f32.xlu0 %v207
      %v212 = vpop.xlane.xlu0 %211
      %213 = vadd.xlane.f32.xlu0 %v208
      %v214 = vpop.xlane.xlu0 %213
      %215 = vadd.xlane.f32.xlu0 %v209
      %v216 = vpop.xlane.xlu0 %215
      %217 = vadd.xlane.f32.xlu0 %v210
      %v218 = vpop.xlane.xlu0 %217
      %v219 = vadd.f32 %v212, 1.0
      %v220 = vadd.f32 %v214, 1.0
      %v221 = vadd.f32 %v216, 1.0
      %v222 = vadd.f32 %v218, 1.0
      %v223 = vmul.f32 %v200, 2.0
      %v224 = vmul.f32 %v202, 2.0
      %v225 = vmul.f32 %v204, 2.0
      %v226 = vmul.f32 %v206, 2.0
      %v227 = vadd.f32 %v223, 1.0
      %v228 = vadd.f32 %v224, 1.0
      %v229 = vadd.f32 %v225, 1.0
      %v230 = vadd.f32 %v226, 1.0
      %v231 = vrcp.pop %v219
      %v232 = vmul.f32 %v227, %v231
      %v233 = vrcp.pop %v220
      %v234 = vmul.f32 %v228, %v233
      %v235 = vrcp.pop %v221
      %v236 = vmul.f32 %v229, %v235
      %v237 = vrcp.pop %v222
      %v238 = vmul.f32 %v230, %v237
      %v239 = vsub.f32 1.0, %v232
      %v240 = vsub.f32 1.0, %v234
      %v241 = vsub.f32 1.0, %v236
      %v242 = vsub.f32 1.0, %v238
      %vm243 = vcmask 7168
      %244 = vst.msk [vmem:[%s2] sm:$0xff] %vm243, %v239
      %245 = vst.msk [vmem:[%s2 + $0x8] sm:$0xff] %vm243, %v240
      %246 = vst.msk [vmem:[%s2 + $0x10] sm:$0xff] %vm243, %v241
      %247 = vst.msk [vmem:[%s2 + $0x18] sm:$0xff] %vm243, %v242
    $region25: #{tpu_custom_call.1} parent=1 // pred_fallthru
      _
    // Predicated region
    $region26: #{tpu_custom_call.1} parent=1 // pred_check
      _
    $region27: #{tpu_custom_call.1} parent=1 // pred_check_branch
      %249 = sbr.rel (0) target = $region29
    $region28: #{tpu_custom_call.1} parent=1 // pred_region
      _
    $region29: #{tpu_custom_call.1} parent=1 // pred_fallthru
      _
    // Predicated region
    $region30: #{tpu_custom_call.1} parent=1 // pred_check
      _
    $region31: #{tpu_custom_call.1} parent=1 // pred_check_branch
      %251 = sbr.rel (0) target = $region33
    $region32: #{tpu_custom_call.1} parent=1 // pred_region
      _
    $region33: #{tpu_custom_call.1} parent=1 // pred_fallthru
      _
    %252 = vsyncpa [#allocation5], 1
    %253 = vsyncpa [#allocation7], 1

</llo_original>
